<compile_context>
chip_gen: v7x
topology: tpu7x:2x2x1
jax: 0.10.0
libtpu: 0.0.40
codegen_flags: <defaults>
</compile_context>

<pallas_src>
import jax
import jax.numpy as jnp
from jax import lax
from jax.experimental import pallas as pl
from jax.experimental.pallas import tpu as pltpu

LEAK = 0.2


def _round_up(x, m):
    return (x + m - 1) // m * m


def _divisor_tile(total, cap, unit):
    """Largest multiple of `unit` that divides `total` and is <= max(cap, unit).

    `total` must itself be a multiple of `unit`.
    """
    t = max(unit, min((cap // unit) * unit, total))
    while total % t:
        t -= unit
    return t


# ------------------------------- Pallas kernel -------------------------------
def _fc_kernel(scales_ref, x_ref, w_ref, b_ref, o_ref):
    """One (tm, tn) tile of leaky_relu(x @ Wt * w_lrmul + b * b_lrmul).

    Grid = (j, i, k); k (axis 2) is the K reduction, accumulated directly into
    the resident f32 output block.
    """
    k = pl.program_id(2)

    @pl.when(k == 0)
    def _():
        o_ref[...] = jnp.zeros_like(o_ref)

    w = w_ref[...]                              # (tk, tn), streamed bf16/f32
    x = x_ref[...].astype(w.dtype)              # (tm, tk) -> match stream dtype
    o_ref[...] += jnp.dot(x, w, preferred_element_type=jnp.float32)

    @pl.when(k == pl.num_programs(2) - 1)
    def _():
        # lrmuls are SMEM scalars: folded onto the f32 accumulator here, so
        # the weight / bias never get a rescaling pass in HBM.
        y = o_ref[...] * scales_ref[0] + b_ref[...] * scales_ref[1]
        o_ref[...] = jnp.where(y >= 0, y, LEAK * y)


# --------------------------------- wrapper ------------------------------------
def fc_forward(x, fc):
    """leaky_relu(x @ (weight * w_lrmul).T + bias * b_lrmul, 0.2)."""
    M, K = x.shape
    assert K == fc.K, (x.shape, fc.K)
    Kp, Np, tk, tn = fc.Kp, fc.Np, fc.tk, fc.tn

    # M tile: sublane-aligned and divides the padded M exactly (no waste).
    Mp = _round_up(M, 8)
    tm = _divisor_tile(Mp, 256, 8)

    # Only the small activation gets a per-call zero pad (exact K reduction);
    # the weight / bias were padded once at init.
    xp = x if (Mp == M and Kp == K) else jnp.pad(x, ((0, Mp - M), (0, Kp - K)))
    scales = jnp.array([fc.w_lrmul, fc.b_lrmul], jnp.float32)

    # (j, i, k): weight tile index is i-invariant -> not re-fetched across M
    # tiles when grid_k == 1.
    grid = (Np // tn, Mp // tm, Kp // tk)

    w_bytes = jnp.dtype(fc.w_stream.dtype).itemsize
    vmem_need = 2 * (tm * tk * 4 + tk * tn * w_bytes + tm * tn * 4) + 2 * tn * 4
    vmem_limit = int(min(max(vmem_need * 3 // 2 + (2 << 20), 16 << 20), 48 << 20))

    out = pl.pallas_call(
        _fc_kernel,
        out_shape=jax.ShapeDtypeStruct((Mp, Np), jnp.float32),
        grid_spec=pltpu.PrefetchScalarGridSpec(
            num_scalar_prefetch=0,
            grid=grid,
            in_specs=[
                pl.BlockSpec(memory_space=pltpu.MemorySpace.SMEM),    # lrmuls
                pl.BlockSpec((tm, tk), lambda j, i, k: (i, k)),       # x
                pl.BlockSpec((tk, tn), lambda j, i, k: (k, j)),       # W^T (K,N)
                pl.BlockSpec((1, tn), lambda j, i, k: (0, j)),        # bias
            ],
            out_specs=pl.BlockSpec((tm, tn), lambda j, i, k: (i, j)),
        ),
        compiler_params=pltpu.CompilerParams(
            dimension_semantics=("parallel", "parallel", "arbitrary"),
            vmem_limit_bytes=vmem_limit),
    )(scales, xp, fc.w_stream, fc.b_pad)

    if Mp == M and Np == fc.N:
        return out
    return out[:M, :fc.N]


# ------------------------ module (mirrors PyTorch FC) --------------------------
class FCPallas:
    """Mirrors the PyTorch FC module's __init__ / forward semantics."""

    def __init__(self, key, in_channels, out_channels, gain=2 ** 0.5,
                 use_wscale=False, lrmul=1.0, bias=True,
                 stream_dtype=jnp.bfloat16):
        he_std = gain * in_channels ** (-0.5)
        if use_wscale:
            init_std = 1.0 / lrmul
            self.w_lrmul = he_std * lrmul
        else:
            init_std = he_std / lrmul
            self.w_lrmul = lrmul
        kw, kb = jax.random.split(key)
        self.weight = jax.random.normal(
            kw, (out_channels, in_channels), jnp.float32) * init_std
        self.b_lrmul = lrmul
        if bias:
            # NOTE: the PyTorch module initializes the bias to zeros; small
            # random values are used here so the bias path is exercised.
            self.bias = 0.1 * jax.random.normal(kb, (out_channels,), jnp.float32)
        else:
            self.bias = None

        # ---- one-time kernel operand prep (constants for this module) ----
        N, K = out_channels, in_channels
        self.N, self.K = N, K
        self.Np = _round_up(N, 128)
        self.Kp = _round_up(K, 128)
        # N tile: lane-dense; kept <= Np/2 when possible so grid_j >= 2
        # (both v7x TensorCores busy even when M is tiny).
        cap_n = 512 if self.Np >= 2048 else 256
        if self.Np >= 256:
            cap_n = min(cap_n, self.Np // 2)
        self.tn = _divisor_tile(self.Np, cap_n, 128)
        # K tile: as large as possible (amortize per-grid-step overhead on the
        # mem-bound weight stream), capped at 2048.
        self.tk = _divisor_tile(self.Kp, 2048, 128)
        # One-time transpose to (K, N), zero-pad, cast to the stream dtype
        # (bf16 default: halves HBM weight bytes; f32 accumulation in-kernel).
        wt = self.weight.T
        if self.Kp != K or self.Np != N:
            wt = jnp.pad(wt, ((0, self.Kp - K), (0, self.Np - N)))
        self.w_stream = wt.astype(stream_dtype)
        b = self.bias if self.bias is not None else jnp.zeros((N,), jnp.float32)
        if self.Np != N:
            b = jnp.pad(b, (0, self.Np - N))
        self.b_pad = b.reshape(1, self.Np).astype(jnp.float32)
        # TODO(synk): optional fp8 weight stream (per-channel scale folded into
        # the same epilogue) for v7x inference.

    def __call__(self, x):
        return fc_forward(x, self)


# ----------------------------- pure-JAX reference ------------------------------
def fc_reference(fc, x, *, bf16_operands=False):
    xr, wr = x, fc.weight
    if bf16_operands:   # model the kernel's bf16-operand / f32-accumulate path
        xr = xr.astype(jnp.bfloat16).astype(jnp.float32)
        wr = wr.astype(jnp.bfloat16).astype(jnp.float32)
    y = jnp.dot(xr, wr.T, precision=lax.Precision.HIGHEST) * fc.w_lrmul
    if fc.bias is not None:
        y = y + fc.bias * fc.b_lrmul
    return jnp.where(y >= 0, y, LEAK * y)


if __name__ == "__main__":
    key = jax.random.PRNGKey(0)
    k1, k2, k3, k4, k5, k6 = jax.random.split(key, 6)

    # Case 1: StyleGAN-mapping-sized FC (use_wscale=True), aligned shapes;
    # bf16 weight stream; grid_j = 2 (N tiling), grid_k = 1.
    B1, IN1, OUT1 = 8, 1024, 512
    fc1 = FCPallas(k1, IN1, OUT1, use_wscale=True)
    x1 = jax.random.normal(k2, (B1, IN1), jnp.float32)
    out1 = jax.block_until_ready(fc1(x1))
    assert out1.shape == (B1, OUT1), out1.shape
    ref1_bf16 = fc_reference(fc1, x1, bf16_operands=True)
    ref1_f32 = fc_reference(fc1, x1)
    assert jnp.allclose(out1, ref1_bf16, rtol=2e-3, atol=2e-3), float(
        jnp.max(jnp.abs(out1 - ref1_bf16)))
    assert jnp.allclose(out1, ref1_f32, rtol=3e-2, atol=3e-2), float(
        jnp.max(jnp.abs(out1 - ref1_f32)))

    # Case 2: small / unaligned shapes (ApplyStyle-style), use_wscale=False,
    # lrmul != 1, f32 weight stream; exercises the padding / slicing path.
    B2, IN2, OUT2 = 2, 64, 32
    fc2 = FCPallas(k3, IN2, OUT2, use_wscale=False, lrmul=0.5,
                   stream_dtype=jnp.float32)
    x2 = jax.random.normal(k4, (B2, IN2), jnp.float32)
    out2 = jax.block_until_ready(fc2(x2))
    assert out2.shape == (B2, OUT2), out2.shape
    ref2_f32 = fc_reference(fc2, x2)
    assert jnp.allclose(out2, ref2_f32, rtol=1e-4, atol=1e-4), float(
        jnp.max(jnp.abs(out2 - ref2_f32)))

    # Case 3: multi-step K reduction (grid_k = 2 via tk = 1152) and 3-way N
    # tiling, bf16 stream.
    B3, IN3, OUT3 = 16, 2304, 384
    fc3 = FCPallas(k5, IN3, OUT3, use_wscale=True)
    x3 = jax.random.normal(k6, (B3, IN3), jnp.float32)
    out3 = jax.block_until_ready(fc3(x3))
    assert out3.shape == (B3, OUT3), out3.shape
    ref3_bf16 = fc_reference(fc3, x3, bf16_operands=True)
    ref3_f32 = fc_reference(fc3, x3)
    assert jnp.allclose(out3, ref3_bf16, rtol=2e-3, atol=2e-3), float(
        jnp.max(jnp.abs(out3 - ref3_bf16)))
    assert jnp.allclose(out3, ref3_f32, rtol=3e-2, atol=3e-2), float(
        jnp.max(jnp.abs(out3 - ref3_f32)))

    print("KERNEL_OK")
</pallas_src>

<mosaic_0001>
module attributes {stable_mosaic.version = 11 : i64} {
  func.func @_fc_kernel(%arg0: i32, %arg1: i32, %arg2: i32, %arg3: memref<2xf32, #tpu.memory_space<smem>>, %arg4: memref<8x1024xf32, #tpu.memory_space<vmem>>, %arg5: memref<1024x256xbf16, #tpu.memory_space<vmem>>, %arg6: memref<1x256xf32, #tpu.memory_space<vmem>>, %arg7: memref<8x256xf32, #tpu.memory_space<vmem>>) attributes {dimension_semantics = [#tpu.dimension_semantics<parallel>, #tpu.dimension_semantics<parallel>, #tpu.dimension_semantics<arbitrary>], iteration_bounds = array<i64: 2, 1, 1>, scalar_prefetch = 0 : i64, scratch_operands = 0 : i64, tpu.core_type = #tpu.core_type<tc>, window_params = [{transform_indices = @transform_0, window_bounds = array<i64: 2>}, {transform_indices = @transform_1, window_bounds = array<i64: 8, 1024>}, {transform_indices = @transform_2, window_bounds = array<i64: 1024, 256>}, {transform_indices = @transform_3, window_bounds = array<i64: 1, 256>}, {transform_indices = @transform_4, window_bounds = array<i64: 8, 256>}]} {
    %c0_i32 = arith.constant 0 : i32
    %0 = arith.cmpi eq, %arg2, %c0_i32 : i32
    %1 = arith.extui %0 : i1 to i32
    %c0_i32_0 = arith.constant 0 : i32
    %2 = arith.cmpi ne, %1, %c0_i32_0 : i32
    scf.if %2 {
      %cst_10 = arith.constant 0.000000e+00 : f32
      %13 = vector.broadcast %cst_10 : f32 to vector<8x256xf32>
      %c0_11 = arith.constant 0 : index
      %c0_12 = arith.constant 0 : index
      %14 = vector.load %arg7[%c0_11, %c0_12] : memref<8x256xf32, #tpu.memory_space<vmem>>, vector<8x256xf32>
      tpu.vector_store %arg7[%c0_11, %c0_12], %13 {strides = array<i32>} : memref<8x256xf32, #tpu.memory_space<vmem>>, vector<8x256xf32>,
    } else {
    }
    %c0 = arith.constant 0 : index
    %c0_1 = arith.constant 0 : index
    %3 = vector.load %arg5[%c0, %c0_1] : memref<1024x256xbf16, #tpu.memory_space<vmem>>, vector<1024x256xbf16>
    %c0_2 = arith.constant 0 : index
    %c0_3 = arith.constant 0 : index
    %4 = vector.load %arg4[%c0_2, %c0_3] : memref<8x1024xf32, #tpu.memory_space<vmem>>, vector<8x1024xf32>
    %5 = arith.truncf %4 : vector<8x1024xf32> to vector<8x1024xbf16>
    %c0_4 = arith.constant 0 : index
    %c0_5 = arith.constant 0 : index
    %6 = vector.load %arg7[%c0_4, %c0_5] : memref<8x256xf32, #tpu.memory_space<vmem>>, vector<8x256xf32>
    %cst = arith.constant dense<0.000000e+00> : vector<8x256xf32>
    %7 = tpu.matmul %5, %3, %cst {dimension_numbers = #tpu.dot_dimension_numbers<[1], [0], [0], [1], [0, 0, 1, 1], [], []>} : vector<8x1024xbf16>, vector<1024x256xbf16>, vector<8x256xf32> -> vector<8x256xf32>
    %8 = arith.addf %6, %7 : vector<8x256xf32>
    %c0_6 = arith.constant 0 : index
    %c0_7 = arith.constant 0 : index
    %9 = vector.load %arg7[%c0_6, %c0_7] : memref<8x256xf32, #tpu.memory_space<vmem>>, vector<8x256xf32>
    tpu.vector_store %arg7[%c0_6, %c0_7], %8 {strides = array<i32>} : memref<8x256xf32, #tpu.memory_space<vmem>>, vector<8x256xf32>,
    %c0_i32_8 = arith.constant 0 : i32
    %10 = arith.cmpi eq, %arg2, %c0_i32_8 : i32
    %11 = arith.extui %10 : i1 to i32
    %c0_i32_9 = arith.constant 0 : i32
    %12 = arith.cmpi ne, %11, %c0_i32_9 : i32
    scf.if %12 {
      %c0_10 = arith.constant 0 : index
      %c0_11 = arith.constant 0 : index
      %13 = vector.load %arg7[%c0_10, %c0_11] : memref<8x256xf32, #tpu.memory_space<vmem>>, vector<8x256xf32>
      %c0_12 = arith.constant 0 : index
      %14 = memref.load %arg3[%c0_12] : memref<2xf32, #tpu.memory_space<smem>>
      %15 = vector.broadcast %14 : f32 to vector<8x256xf32>
      %16 = arith.mulf %13, %15 : vector<8x256xf32>
      %c0_13 = arith.constant 0 : index
      %c0_14 = arith.constant 0 : index
      %17 = vector.load %arg6[%c0_13, %c0_14] : memref<1x256xf32, #tpu.memory_space<vmem>>, vector<1x256xf32>
      %c1 = arith.constant 1 : index
      %18 = memref.load %arg3[%c1] : memref<2xf32, #tpu.memory_space<smem>>
      %19 = vector.broadcast %18 : f32 to vector<1x256xf32>
      %20 = arith.mulf %17, %19 : vector<1x256xf32>
      %21 = vector.broadcast %20 : vector<1x256xf32> to vector<8x256xf32>
      %22 = arith.addf %16, %21 : vector<8x256xf32>
      %cst_15 = arith.constant 0.000000e+00 : f32
      %23 = vector.broadcast %cst_15 : f32 to vector<8x256xf32>
      %24 = arith.cmpf oge, %22, %23 : vector<8x256xf32>
      %cst_16 = arith.constant 2.000000e-01 : f32
      %25 = vector.broadcast %cst_16 : f32 to vector<8x256xf32>
      %26 = arith.mulf %25, %22 : vector<8x256xf32>
      %27 = arith.select %24, %22, %26 : vector<8x256xi1>, vector<8x256xf32>
      %c0_17 = arith.constant 0 : index
      %c0_18 = arith.constant 0 : index
      %28 = vector.load %arg7[%c0_17, %c0_18] : memref<8x256xf32, #tpu.memory_space<vmem>>, vector<8x256xf32>
      tpu.vector_store %arg7[%c0_17, %c0_18], %27 {strides = array<i32>} : memref<8x256xf32, #tpu.memory_space<vmem>>, vector<8x256xf32>,
    } else {
    }
    return
  }
  func.func @transform_0(%arg0: i32, %arg1: i32, %arg2: i32) -> i32 {
    %c0_i32 = arith.constant 0 : i32
    %c0_i32_0 = arith.constant 0 : i32
    return %c0_i32 : i32
  }
  func.func @transform_1(%arg0: i32, %arg1: i32, %arg2: i32) -> (i32, i32) {
    %c0_i32 = arith.constant 0 : i32
    return %arg1, %arg2 : i32, i32
  }
  func.func @transform_2(%arg0: i32, %arg1: i32, %arg2: i32) -> (i32, i32) {
    %c0_i32 = arith.constant 0 : i32
    return %arg2, %arg0 : i32, i32
  }
  func.func @transform_3(%arg0: i32, %arg1: i32, %arg2: i32) -> (i32, i32) {
    %c0_i32 = arith.constant 0 : i32
    %c0_i32_0 = arith.constant 0 : i32
    return %c0_i32, %arg0 : i32, i32
  }
  func.func @transform_4(%arg0: i32, %arg1: i32, %arg2: i32) -> (i32, i32) {
    %c0_i32 = arith.constant 0 : i32
    return %arg1, %arg0 : i32, i32
  }
}

</mosaic_0001>

<llo_original>
// kernel: tpu_custom_call.1
$region0: #{tpu_custom_call.1}
  #allocation0 [shape = 'u32[]', space=smem, size = 0x4, offset = 0x4, fixed_abs, tag = 'smem constant byte address 0x4 - core index']
  #allocation1 [shape = 'u32[144,128]{1,0:T(1,128)}', space=vmem, size = 0x12000, scoped, tag = 'internal scratch']
  %s0 = inlined_call_operand.hbm [shape: f32[2], index: 0, kind: input, shape index: {}]
  %s1 = inlined_call_operand.hbm [shape: f32[8,1024], index: 1, kind: input, shape index: {}]
  %s2 = inlined_call_operand.hbm [shape: bf16[1024,512], index: 2, kind: input, shape index: {}]
  %s3 = inlined_call_operand.vmem [shape: f32[1,512], index: 3, kind: input, shape index: {}]
  %s4 = inlined_call_operand.hbm [shape: f32[8,512], index: 4, kind: output, shape index: {}]
  %s5 = sld [smem:[#allocation0]]
  $region69: #{tpu_custom_call.1} parent=0
    _
  %s7 = ssub.s32 1, %s5
  %s8 = scalar_select 0, %s7, %s5
  $region1: #{tpu_custom_call.1} parent=0
    #allocation2 [shape = 'u8[512]{0}', space=smem, size = 0x200, scoped, tag = 'input window, operand 0, single buffered']
    #allocation3 [shape = 's32[2]{0}', space=sflag, size = 0x8, scoped, tag = 'scoped memory for tpu_custom_call.1']
    #allocation4 [shape = 's32[2]{0}', space=sflag, size = 0x8, scoped, tag = 'scoped memory for tpu_custom_call.1']
    #allocation5 [shape = 's32[2]{0}', space=sflag, size = 0x8, scoped, tag = 'scoped memory for tpu_custom_call.1']
    #allocation6 [shape = 'u8[32768]{0}', space=vmem, size = 0x8000, scoped, tag = 'input window, operand 1, single buffered']
    #allocation7 [shape = 'u8[1048576]{0}', space=vmem, size = 0x100000, scoped, tag = 'input window, operand 2']
    #allocation8 [shape = 's32[2]{0}', space=sflag, size = 0x8, scoped, tag = 'scoped memory for tpu_custom_call.1']
    #allocation9 [shape = 'u8[16384]{0}', space=vmem, size = 0x4000, scoped, tag = 'output window, operand 0']
    %9 = vsyncpa [#allocation5], 0
    %10 = vsyncpa [#allocation3], 0
    %11 = vsyncpa [#allocation8], 0
    %s12 = scalar_lea.sflag [#allocation8], 1
    %13 = vsyncpa %s12, 0
    %14 = vsyncpa [#allocation4], 0
    %s15 = scalar_lea.sflag [#allocation4], 1
    %16 = vsyncpa %s15, 0
    loop: start=0, step=1, limit=4
    $region2: #{tpu_custom_call.1} parent=1 // loop_pre_header
      _
    $region3: #{tpu_custom_call.1} parent=1 // loop_header
      %s18 = sphi 0, %s22
      %p19 = scmp.ge.s32.totalorder %s18, 4
      %s25 = sphi 0, %s44
      %s26 = sphi 0, %s40
      %s27 = sphi 0, %s36
      %s28 = sphi 0, %s25
      %s29 = sphi 0, %s26
      %s30 = sphi 0, %s27
      %s31 = sphi 0, %s28
      %s32 = sphi 0, %s29
      %s33 = sphi 0, %s30
      %s45 = sphi 0, %s45
      %s47 = sphi 0, %s45
      %s48 = sphi 0, %s47
      %s62 = sphi 0, %s48
      %s70 = sphi 0, %s72
      %s73 = sphi 0, %s70
      %s74 = sphi 0, %s73
      %s90 = sphi 0, %s74
      %s98 = sphi 0, %s100
      %s101 = sphi 0, %s98
      %s102 = sphi 0, %s101
      %s118 = sphi 0, %s102
      %s124 = sphi 0, %s126
      %s127 = sphi 0, %s124
      %s128 = sphi 0, %s127
      %s144 = sphi 0, %s128
      %s152 = sphi 0, %s154
      %s155 = sphi 0, %s152
      %s156 = sphi 0, %s155
      %s172 = sphi 0, %s156
    $region4: #{tpu_custom_call.1} parent=1 // loop_header_branch
      %21 = sbr.rel (%p19) target = $region8
    $region5: #{tpu_custom_call.1} parent=1 // loop_body
      %s23 = ssub.s32 %s18, 1
      %s24 = ssub.s32 %s18, 2
      %s34 = sadd.s32 1, %s27
      %p35 = scmp.ge.s32.totalorder %s34, 1
      %s36 = scalar_select %p35, 0, %s34
      %s37 = sadd.s32 1, %s26
      %s38 = scalar_select %p35, %s37, %s26
      %p39 = scmp.ge.s32.totalorder %s38, 1
      %s40 = scalar_select %p39, 0, %s38
      %s41 = sadd.s32 1, %s25
      %s42 = scalar_select %p39, %s41, %s25
      %p43 = scmp.ge.s32.totalorder %s42, 2
      %s44 = scalar_select %p43, 0, %s42
      %s46 = sadd.s32 %s45, 1
      %p49 = scmp.eq.s32.totalorder %s18, 1
      %p50 = scmp.ne.s32.totalorder %s45, %s47
      %p51 = scmp.eq.s32.totalorder %s18, 0
      %p52 = por %p50, %p51
      %p53 = scmp.ne.s32.totalorder %s45, %s47
      %p54 = scmp.eq.s32.totalorder %s23, 1
      %p55 = por %p53, %p54
      %p56 = scmp.ne.s32.totalorder %s47, %s48
      %p57 = scmp.eq.s32.totalorder %s23, 0
      %p58 = por %p56, %p57
      %p59 = scmp.ne.s32.totalorder %s47, %s48
      %p60 = scmp.eq.s32.totalorder %s24, 1
      %p61 = por %p59, %p60
      %p63 = scmp.ne.s32.totalorder %s48, %s62
      %p64 = scmp.eq.s32.totalorder %s24, 0
      %p65 = por %p63, %p64
      %s66 = ssub.s32 %s26, %s40
      %s67 = ssub.s32 %s27, %s36
      %s68 = sor.u32 %s66, %s67
      %p69 = scmp.eq.s32.totalorder %s68, 0
      %s71 = sadd.s32 %s70, 1
      %s72 = scalar_select %p69, %s70, %s71
      %p75 = pneg %p69
      %p76 = scmp.eq.s32.totalorder %s18, 1
      %p77 = por %p75, %p76
      %p78 = scmp.ne.s32.totalorder %s70, %s73
      %p79 = scmp.eq.s32.totalorder %s18, 0
      %p80 = por %p78, %p79
      %p81 = scmp.ne.s32.totalorder %s70, %s73
      %p82 = scmp.eq.s32.totalorder %s23, 1
      %p83 = por %p81, %p82
      %p84 = scmp.ne.s32.totalorder %s73, %s74
      %p85 = scmp.eq.s32.totalorder %s23, 0
      %p86 = por %p84, %p85
      %p87 = scmp.ne.s32.totalorder %s73, %s74
      %p88 = scmp.eq.s32.totalorder %s24, 1
      %p89 = por %p87, %p88
      %p91 = scmp.ne.s32.totalorder %s74, %s90
      %p92 = scmp.eq.s32.totalorder %s24, 0
      %p93 = por %p91, %p92
      %s94 = ssub.s32 %s27, %s36
      %s95 = ssub.s32 %s25, %s44
      %s96 = sor.u32 %s94, %s95
      %p97 = scmp.eq.s32.totalorder %s96, 0
      %s99 = sadd.s32 %s98, 1
      %s100 = scalar_select %p97, %s98, %s99
      %p103 = pneg %p97
      %p104 = scmp.eq.s32.totalorder %s18, 1
      %p105 = por %p103, %p104
      %p106 = scmp.ne.s32.totalorder %s98, %s101
      %p107 = scmp.eq.s32.totalorder %s18, 0
      %p108 = por %p106, %p107
      %p109 = scmp.ne.s32.totalorder %s98, %s101
      %p110 = scmp.eq.s32.totalorder %s23, 1
      %p111 = por %p109, %p110
      %p112 = scmp.ne.s32.totalorder %s101, %s102
      %p113 = scmp.eq.s32.totalorder %s23, 0
      %p114 = por %p112, %p113
      %p115 = scmp.ne.s32.totalorder %s101, %s102
      %p116 = scmp.eq.s32.totalorder %s24, 1
      %p117 = por %p115, %p116
      %p119 = scmp.ne.s32.totalorder %s102, %s118
      %p120 = scmp.eq.s32.totalorder %s24, 0
      %p121 = por %p119, %p120
      %s122 = ssub.s32 %s25, %s44
      %p123 = scmp.eq.s32.totalorder %s122, 0
      %s125 = sadd.s32 %s124, 1
      %s126 = scalar_select %p123, %s124, %s125
      %p129 = pneg %p123
      %p130 = scmp.eq.s32.totalorder %s18, 1
      %p131 = por %p129, %p130
      %p132 = scmp.ne.s32.totalorder %s124, %s127
      %p133 = scmp.eq.s32.totalorder %s18, 0
      %p134 = por %p132, %p133
      %p135 = scmp.ne.s32.totalorder %s124, %s127
      %p136 = scmp.eq.s32.totalorder %s23, 1
      %p137 = por %p135, %p136
      %p138 = scmp.ne.s32.totalorder %s127, %s128
      %p139 = scmp.eq.s32.totalorder %s23, 0
      %p140 = por %p138, %p139
      %p141 = scmp.ne.s32.totalorder %s127, %s128
      %p142 = scmp.eq.s32.totalorder %s24, 1
      %p143 = por %p141, %p142
      %p145 = scmp.ne.s32.totalorder %s128, %s144
      %p146 = scmp.eq.s32.totalorder %s24, 0
      %p147 = por %p145, %p146
      %s148 = ssub.s32 %s26, %s40
      %s149 = ssub.s32 %s25, %s44
      %s150 = sor.u32 %s148, %s149
      %p151 = scmp.eq.s32.totalorder %s150, 0
      %s153 = sadd.s32 %s152, 1
      %s154 = scalar_select %p151, %s152, %s153
      %p157 = pneg %p151
      %p158 = scmp.eq.s32.totalorder %s18, 1
      %p159 = por %p157, %p158
      %p160 = scmp.ne.s32.totalorder %s152, %s155
      %p161 = scmp.eq.s32.totalorder %s18, 0
      %p162 = por %p160, %p161
      %p163 = scmp.ne.s32.totalorder %s152, %s155
      %p164 = scmp.eq.s32.totalorder %s23, 1
      %p165 = por %p163, %p164
      %p166 = scmp.ne.s32.totalorder %s155, %s156
      %p167 = scmp.eq.s32.totalorder %s23, 0
      %p168 = por %p166, %p167
      %p169 = scmp.ne.s32.totalorder %s155, %s156
      %p170 = scmp.eq.s32.totalorder %s24, 1
      %p171 = por %p169, %p170
      %p173 = scmp.ne.s32.totalorder %s156, %s172
      %p174 = scmp.eq.s32.totalorder %s24, 0
      %p175 = por %p173, %p174
      %p176 = scmp.le.s32.totalorder 1, %s18
      %p177 = scmp.lt.s32.totalorder %s18, 3
      %p178 = pnand %p176, %p177
      %p179 = pneg %p178
      // Predicated region
      $region9: #{tpu_custom_call.1} parent=5 // pred_check
        _
      $region10: #{tpu_custom_call.1} parent=5 // pred_check_branch
        %181 = sbr.rel (%p178) target = $region12
      $region11: #{tpu_custom_call.1} parent=5 // pred_region
        %s182 = ssub.s32 %s18, 1
        // Predicated region
        $region13: #{tpu_custom_call.1} parent=11 // pred_check
          %p183 = pneg %p58
        $region14: #{tpu_custom_call.1} parent=11 // pred_check_branch
          %185 = sbr.rel (%p183) target = $region16
        $region15: #{tpu_custom_call.1} parent=11 // pred_region
          %s187 = ssub.s32 16, 16
          %188 = vsyncadd [#allocation5], %s187
          %191 = dma.hbm_to_smem %s0, 16, [#allocation2], [#allocation5]
        $region16: #{tpu_custom_call.1} parent=11 // pred_fallthru
          _
        // Predicated region
        $region17: #{tpu_custom_call.1} parent=11 // pred_check
          %p192 = pneg %p86
        $region18: #{tpu_custom_call.1} parent=11 // pred_check_branch
          %194 = sbr.rel (%p192) target = $region20
        $region19: #{tpu_custom_call.1} parent=11 // pred_region
          %s195 = smul.u32 8, %s30
          %s197 = ssub.s32 1024, 1024
          %198 = vsyncadd [#allocation3], %s197
          %s199 = smul.addr %s29, 8
          %s200 = sadd.s32 %s195, %s199
          %s201 = smul.addr %s200, 128
          %s202 = scalar_lea.hbm %s1, %s201
          %s204 = sshll.u32 [#allocation6], 4
          %s205 = int_to_ptr.vmem [resolvable:$true] %s204
          %207 = dma.hbm_to_vmem [thread:$0]  %s202, 1024, %s205, [#allocation3]
        $region20: #{tpu_custom_call.1} parent=11 // pred_fallthru
          _
      $region12: #{tpu_custom_call.1} parent=5 // pred_fallthru
        _
      %p208 = scmp.lt.s32.totalorder %s18, 2
      // Predicated region
      $region21: #{tpu_custom_call.1} parent=5 // pred_check
        %p209 = pneg %p208
      $region22: #{tpu_custom_call.1} parent=5 // pred_check_branch
        %211 = sbr.rel (%p209) target = $region24
      $region23: #{tpu_custom_call.1} parent=5 // pred_region
        // Predicated region
        $region25: #{tpu_custom_call.1} parent=23 // pred_check
          %p212 = pneg %p108
        $region26: #{tpu_custom_call.1} parent=23 // pred_check_branch
          %214 = sbr.rel (%p212) target = $region28
        $region27: #{tpu_custom_call.1} parent=23 // pred_region
          %s215 = sand.u32 %s98, 1
          %s216 = scalar_lea.sflag [#allocation8], %s215
          %s217 = sand.u32 %s98, 1
          %s218 = smul.addr %s217, 1024
          %s219 = scalar_lea.vmem [#allocation7], %s218
          %s220 = smul.u32 128, %s27
          %s221 = smul.u32 2, %s25
          %s223 = ssub.s32 16384, 16384
          %224 = vsyncadd %s216, %s223
          %s225 = smul.addr %s220, 4
          %s226 = sadd.s32 %s221, %s225
          %s227 = smul.addr %s226, 64
          %s228 = scalar_lea.hbm %s2, %s227
          %s229 = sshll.u32 %s219, 4
          %s230 = int_to_ptr.vmem [resolvable:$true] %s229
          %235 = dma.hbm_to_vmem [thread:$0]  %s228, 16384, %s230, %s216, 256, 128, 8
        $region28: #{tpu_custom_call.1} parent=23 // pred_fallthru
          _
        // Predicated region
        $region29: #{tpu_custom_call.1} parent=23 // pred_check
          %p236 = pneg %p134
        $region30: #{tpu_custom_call.1} parent=23 // pred_check_branch
          %238 = sbr.rel (%p236) target = $region32
        $region31: #{tpu_custom_call.1} parent=23 // pred_region
          %s239 = smul.u32 2, %s25
          %p240 = scmp.lt.s32.totalorder %s239, 3
          %s241 = scalar_select %p240, %s239, 3
          %s242 = scalar_lea.vmem %s3, %s241
          %s243 = smul.u32 2, %s25
        $region32: #{tpu_custom_call.1} parent=23 // pred_fallthru
          _
      $region24: #{tpu_custom_call.1} parent=5 // pred_fallthru
        _
      %p244 = scmp.le.s32.totalorder 1, %s18
      %p245 = scmp.lt.s32.totalorder %s18, 3
      %p246 = pnand %p244, %p245
      %p247 = pneg %p246
      // Predicated region
      $region33: #{tpu_custom_call.1} parent=5 // pred_check
        _
      $region34: #{tpu_custom_call.1} parent=5 // pred_check_branch
        %249 = sbr.rel (%p246) target = $region36
      $region35: #{tpu_custom_call.1} parent=5 // pred_region
        %s250 = ssub.s32 %s18, 1
        // Predicated region
        $region37: #{tpu_custom_call.1} parent=35 // pred_check
          %p251 = pneg %p58
        $region38: #{tpu_custom_call.1} parent=35 // pred_check_branch
          %253 = sbr.rel (%p251) target = $region40
        $region39: #{tpu_custom_call.1} parent=35 // pred_region
          %254 = dma.done [#allocation5], 16
        $region40: #{tpu_custom_call.1} parent=35 // pred_fallthru
          _
        // Predicated region
        $region41: #{tpu_custom_call.1} parent=35 // pred_check
          %p255 = pneg %p86
        $region42: #{tpu_custom_call.1} parent=35 // pred_check_branch
          %257 = sbr.rel (%p255) target = $region44
        $region43: #{tpu_custom_call.1} parent=35 // pred_region
          %258 = dma.done [#allocation3], 1024
        $region44: #{tpu_custom_call.1} parent=35 // pred_fallthru
          _
        %s259 = sand.u32 %s101, 1
        %s260 = scalar_lea.sflag [#allocation8], %s259
        %s261 = sand.u32 %s101, 1
        %s262 = smul.addr %s261, 1024
        %s263 = scalar_lea.vmem [#allocation7], %s262
        // Predicated region
        $region45: #{tpu_custom_call.1} parent=35 // pred_check
          %p264 = pneg %p114
        $region46: #{tpu_custom_call.1} parent=35 // pred_check_branch
          %266 = sbr.rel (%p264) target = $region48
        $region47: #{tpu_custom_call.1} parent=35 // pred_region
          %267 = dma.done %s260, 16384
        $region48: #{tpu_custom_call.1} parent=35 // pred_fallthru
          _
        %268 = sfence
        %p269 = pneg %p58
        %p270 = pneg %p55
        %p271 = pneg %p86
        %p272 = pneg %p83
        %s273 = sand.u32 %s101, 1
        %s274 = scalar_lea.sflag [#allocation8], %s273
        %s275 = sand.u32 %s101, 1
        %s276 = smul.addr %s275, 1024
        %s277 = scalar_lea.vmem [#allocation7], %s276
        %p278 = pneg %p114
        %p279 = pneg %p111
        %s280 = smul.u32 2, %s28
        %p281 = scmp.lt.s32.totalorder %s280, 3
        %s282 = scalar_select %p281, %s280, 3
        %s283 = scalar_lea.vmem %s3, %s282
        %p284 = pneg %p140
        %p285 = pneg %p137
        %p286 = pneg %p168
        %p287 = pneg %p165
        %s288 = sand.u32 %s155, 1
        %s289 = scalar_lea.sflag [#allocation4], %s288
        %s290 = sand.u32 %s155, 1
        %s291 = smul.addr %s290, 16
        %s292 = scalar_lea.vmem [#allocation9], %s291
        %s293 = smul.u32 8, %s30
        %s294 = smul.u32 128, %s30
        %s295 = smul.u32 2, %s28
        %s296 = smul.u32 2, %s28
        %p297 = scmp.lt.s32.totalorder %s296, 3
        %s298 = scalar_select %p297, %s296, 3
        %s299 = scalar_lea.vmem %s3, %s298
        %s300 = smul.u32 2, %s28
        %s301 = smul.u32 2, %s28
        %p302 = scmp.eq.s32.totalorder %s30, 0
        // Predicated region
        $region49: #{tpu_custom_call.1} parent=35 // pred_check
          %p303 = pneg %p302
        $region50: #{tpu_custom_call.1} parent=35 // pred_check_branch
          %305 = sbr.rel (%p303) target = $region52
        $region51: #{tpu_custom_call.1} parent=35 // pred_region
          %306 = vst [vmem:[%s292] sm:$0xff] 0.0
          %307 = vst [vmem:[%s292 + $0x8] sm:$0xff] 0.0
        $region52: #{tpu_custom_call.1} parent=35 // pred_fallthru
          _
        %v308 = vld [vmem:[%s263] sm:$0xff]
        %v309 = vld [vmem:[%s263 + $0x8] sm:$0xff]
        %v310 = vld [vmem:[%s263 + $0x10] sm:$0xff]
        %v311 = vld [vmem:[%s263 + $0x18] sm:$0xff]
        %v312 = vld [vmem:[%s263 + $0x20] sm:$0xff]
        %v313 = vld [vmem:[%s263 + $0x28] sm:$0xff]
        %v314 = vld [vmem:[%s263 + $0x30] sm:$0xff]
        %v315 = vld [vmem:[%s263 + $0x38] sm:$0xff]
        %v316 = vld [vmem:[%s263 + $0x40] sm:$0xff]
        %v317 = vld [vmem:[%s263 + $0x48] sm:$0xff]
        %v318 = vld [vmem:[%s263 + $0x50] sm:$0xff]
        %v319 = vld [vmem:[%s263 + $0x58] sm:$0xff]
        %v320 = vld [vmem:[%s263 + $0x60] sm:$0xff]
        %v321 = vld [vmem:[%s263 + $0x68] sm:$0xff]
        %v322 = vld [vmem:[%s263 + $0x70] sm:$0xff]
        %v323 = vld [vmem:[%s263 + $0x78] sm:$0xff]
        %v324 = vld [vmem:[%s263 + $0x80] sm:$0xff]
        %v325 = vld [vmem:[%s263 + $0x88] sm:$0xff]
        %v326 = vld [vmem:[%s263 + $0x90] sm:$0xff]
        %v327 = vld [vmem:[%s263 + $0x98] sm:$0xff]
        %v328 = vld [vmem:[%s263 + $0xa0] sm:$0xff]
        %v329 = vld [vmem:[%s263 + $0xa8] sm:$0xff]
        %v330 = vld [vmem:[%s263 + $0xb0] sm:$0xff]
        %v331 = vld [vmem:[%s263 + $0xb8] sm:$0xff]
        %v332 = vld [vmem:[%s263 + $0xc0] sm:$0xff]
        %v333 = vld [vmem:[%s263 + $0xc8] sm:$0xff]
        %v334 = vld [vmem:[%s263 + $0xd0] sm:$0xff]
        %v335 = vld [vmem:[%s263 + $0xd8] sm:$0xff]
        %v336 = vld [vmem:[%s263 + $0xe0] sm:$0xff]
        %v337 = vld [vmem:[%s263 + $0xe8] sm:$0xff]
        %v338 = vld [vmem:[%s263 + $0xf0] sm:$0xff]
        %v339 = vld [vmem:[%s263 + $0xf8] sm:$0xff]
        %v340 = vld [vmem:[%s263 + $0x100] sm:$0xff]
        %v341 = vld [vmem:[%s263 + $0x108] sm:$0xff]
        %v342 = vld [vmem:[%s263 + $0x110] sm:$0xff]
        %v343 = vld [vmem:[%s263 + $0x118] sm:$0xff]
        %v344 = vld [vmem:[%s263 + $0x120] sm:$0xff]
        %v345 = vld [vmem:[%s263 + $0x128] sm:$0xff]
        %v346 = vld [vmem:[%s263 + $0x130] sm:$0xff]
        %v347 = vld [vmem:[%s263 + $0x138] sm:$0xff]
        %v348 = vld [vmem:[%s263 + $0x140] sm:$0xff]
        %v349 = vld [vmem:[%s263 + $0x148] sm:$0xff]
        %v350 = vld [vmem:[%s263 + $0x150] sm:$0xff]
        %v351 = vld [vmem:[%s263 + $0x158] sm:$0xff]
        %v352 = vld [vmem:[%s263 + $0x160] sm:$0xff]
        %v353 = vld [vmem:[%s263 + $0x168] sm:$0xff]
        %v354 = vld [vmem:[%s263 + $0x170] sm:$0xff]
        %v355 = vld [vmem:[%s263 + $0x178] sm:$0xff]
        %v356 = vld [vmem:[%s263 + $0x180] sm:$0xff]
        %v357 = vld [vmem:[%s263 + $0x188] sm:$0xff]
        %v358 = vld [vmem:[%s263 + $0x190] sm:$0xff]
        %v359 = vld [vmem:[%s263 + $0x198] sm:$0xff]
        %v360 = vld [vmem:[%s263 + $0x1a0] sm:$0xff]
        %v361 = vld [vmem:[%s263 + $0x1a8] sm:$0xff]
        %v362 = vld [vmem:[%s263 + $0x1b0] sm:$0xff]
        %v363 = vld [vmem:[%s263 + $0x1b8] sm:$0xff]
        %v364 = vld [vmem:[%s263 + $0x1c0] sm:$0xff]
        %v365 = vld [vmem:[%s263 + $0x1c8] sm:$0xff]
        %v366 = vld [vmem:[%s263 + $0x1d0] sm:$0xff]
        %v367 = vld [vmem:[%s263 + $0x1d8] sm:$0xff]
        %v368 = vld [vmem:[%s263 + $0x1e0] sm:$0xff]
        %v369 = vld [vmem:[%s263 + $0x1e8] sm:$0xff]
        %v370 = vld [vmem:[%s263 + $0x1f0] sm:$0xff]
        %v371 = vld [vmem:[%s263 + $0x1f8] sm:$0xff]
        %v372 = vld [vmem:[%s263 + $0x200] sm:$0xff]
        %v373 = vld [vmem:[%s263 + $0x208] sm:$0xff]
        %v374 = vld [vmem:[%s263 + $0x210] sm:$0xff]
        %v375 = vld [vmem:[%s263 + $0x218] sm:$0xff]
        %v376 = vld [vmem:[%s263 + $0x220] sm:$0xff]
        %v377 = vld [vmem:[%s263 + $0x228] sm:$0xff]
        %v378 = vld [vmem:[%s263 + $0x230] sm:$0xff]
        %v379 = vld [vmem:[%s263 + $0x238] sm:$0xff]
        %v380 = vld [vmem:[%s263 + $0x240] sm:$0xff]
        %v381 = vld [vmem:[%s263 + $0x248] sm:$0xff]
        %v382 = vld [vmem:[%s263 + $0x250] sm:$0xff]
        %v383 = vld [vmem:[%s263 + $0x258] sm:$0xff]
        %v384 = vld [vmem:[%s263 + $0x260] sm:$0xff]
        %v385 = vld [vmem:[%s263 + $0x268] sm:$0xff]
        %v386 = vld [vmem:[%s263 + $0x270] sm:$0xff]
        %v387 = vld [vmem:[%s263 + $0x278] sm:$0xff]
        %v388 = vld [vmem:[%s263 + $0x280] sm:$0xff]
        %v389 = vld [vmem:[%s263 + $0x288] sm:$0xff]
        %v390 = vld [vmem:[%s263 + $0x290] sm:$0xff]
        %v391 = vld [vmem:[%s263 + $0x298] sm:$0xff]
        %v392 = vld [vmem:[%s263 + $0x2a0] sm:$0xff]
        %v393 = vld [vmem:[%s263 + $0x2a8] sm:$0xff]
        %v394 = vld [vmem:[%s263 + $0x2b0] sm:$0xff]
        %v395 = vld [vmem:[%s263 + $0x2b8] sm:$0xff]
        %v396 = vld [vmem:[%s263 + $0x2c0] sm:$0xff]
        %v397 = vld [vmem:[%s263 + $0x2c8] sm:$0xff]
        %v398 = vld [vmem:[%s263 + $0x2d0] sm:$0xff]
        %v399 = vld [vmem:[%s263 + $0x2d8] sm:$0xff]
        %v400 = vld [vmem:[%s263 + $0x2e0] sm:$0xff]
        %v401 = vld [vmem:[%s263 + $0x2e8] sm:$0xff]
        %v402 = vld [vmem:[%s263 + $0x2f0] sm:$0xff]
        %v403 = vld [vmem:[%s263 + $0x2f8] sm:$0xff]
        %v404 = vld [vmem:[%s263 + $0x300] sm:$0xff]
        %v405 = vld [vmem:[%s263 + $0x308] sm:$0xff]
        %v406 = vld [vmem:[%s263 + $0x310] sm:$0xff]
        %v407 = vld [vmem:[%s263 + $0x318] sm:$0xff]
        %v408 = vld [vmem:[%s263 + $0x320] sm:$0xff]
        %v409 = vld [vmem:[%s263 + $0x328] sm:$0xff]
        %v410 = vld [vmem:[%s263 + $0x330] sm:$0xff]
        %v411 = vld [vmem:[%s263 + $0x338] sm:$0xff]
        %v412 = vld [vmem:[%s263 + $0x340] sm:$0xff]
        %v413 = vld [vmem:[%s263 + $0x348] sm:$0xff]
        %v414 = vld [vmem:[%s263 + $0x350] sm:$0xff]
        %v415 = vld [vmem:[%s263 + $0x358] sm:$0xff]
        %v416 = vld [vmem:[%s263 + $0x360] sm:$0xff]
        %v417 = vld [vmem:[%s263 + $0x368] sm:$0xff]
        %v418 = vld [vmem:[%s263 + $0x370] sm:$0xff]
        %v419 = vld [vmem:[%s263 + $0x378] sm:$0xff]
        %v420 = vld [vmem:[%s263 + $0x380] sm:$0xff]
        %v421 = vld [vmem:[%s263 + $0x388] sm:$0xff]
        %v422 = vld [vmem:[%s263 + $0x390] sm:$0xff]
        %v423 = vld [vmem:[%s263 + $0x398] sm:$0xff]
        %v424 = vld [vmem:[%s263 + $0x3a0] sm:$0xff]
        %v425 = vld [vmem:[%s263 + $0x3a8] sm:$0xff]
        %v426 = vld [vmem:[%s263 + $0x3b0] sm:$0xff]
        %v427 = vld [vmem:[%s263 + $0x3b8] sm:$0xff]
        %v428 = vld [vmem:[%s263 + $0x3c0] sm:$0xff]
        %v429 = vld [vmem:[%s263 + $0x3c8] sm:$0xff]
        %v430 = vld [vmem:[%s263 + $0x3d0] sm:$0xff]
        %v431 = vld [vmem:[%s263 + $0x3d8] sm:$0xff]
        %v432 = vld [vmem:[%s263 + $0x3e0] sm:$0xff]
        %v433 = vld [vmem:[%s263 + $0x3e8] sm:$0xff]
        %v434 = vld [vmem:[%s263 + $0x3f0] sm:$0xff]
        %v435 = vld [vmem:[%s263 + $0x3f8] sm:$0xff]
        %v436 = vld [vmem:[#allocation6] sm:$0xff]
        %v437 = vld [vmem:[#allocation6 + $0x8] sm:$0xff]
        %v438 = vld [vmem:[#allocation6 + $0x10] sm:$0xff]
        %v439 = vld [vmem:[#allocation6 + $0x18] sm:$0xff]
        %v440 = vld [vmem:[#allocation6 + $0x20] sm:$0xff]
        %v441 = vld [vmem:[#allocation6 + $0x28] sm:$0xff]
        %v442 = vld [vmem:[#allocation6 + $0x30] sm:$0xff]
        %v443 = vld [vmem:[#allocation6 + $0x38] sm:$0xff]
        %v444 = vpack.c.bf16 %v436, %v436
        %v445 = vpack.c.bf16 %v437, %v437
        %v446 = vpack.c.bf16 %v438, %v438
        %v447 = vpack.c.bf16 %v439, %v439
        %v448 = vpack.c.bf16 %v440, %v440
        %v449 = vpack.c.bf16 %v441, %v441
        %v450 = vpack.c.bf16 %v442, %v442
        %v451 = vpack.c.bf16 %v443, %v443
        %v452 = vld [vmem:[%s292] sm:$0xff]
        %v453 = vld [vmem:[%s292 + $0x8] sm:$0xff]
        %v582 = vunpack.c.l.b16 %v308
        %v583 = vunpack.c.h.b16 %v308
        %v584 = vunpack.c.l.b16 %v309
        %v585 = vunpack.c.h.b16 %v309
        %v586 = vunpack.c.l.b16 %v310
        %v587 = vunpack.c.h.b16 %v310
        %v588 = vunpack.c.l.b16 %v311
        %v589 = vunpack.c.h.b16 %v311
        %v590 = vunpack.c.l.b16 %v312
        %v591 = vunpack.c.h.b16 %v312
        %v592 = vunpack.c.l.b16 %v313
        %v593 = vunpack.c.h.b16 %v313
        %v594 = vunpack.c.l.b16 %v314
        %v595 = vunpack.c.h.b16 %v314
        %v596 = vunpack.c.l.b16 %v315
        %v597 = vunpack.c.h.b16 %v315
        %v598 = vunpack.c.l.b16 %v316
        %v599 = vunpack.c.h.b16 %v316
        %v600 = vunpack.c.l.b16 %v317
        %v601 = vunpack.c.h.b16 %v317
        %v602 = vunpack.c.l.b16 %v318
        %v603 = vunpack.c.h.b16 %v318
        %v604 = vunpack.c.l.b16 %v319
        %v605 = vunpack.c.h.b16 %v319
        %v606 = vunpack.c.l.b16 %v320
        %v607 = vunpack.c.h.b16 %v320
        %v608 = vunpack.c.l.b16 %v321
        %v609 = vunpack.c.h.b16 %v321
        %v610 = vunpack.c.l.b16 %v322
        %v611 = vunpack.c.h.b16 %v322
        %v612 = vunpack.c.l.b16 %v323
        %v613 = vunpack.c.h.b16 %v323
        %v614 = vunpack.c.l.b16 %v324
        %v615 = vunpack.c.h.b16 %v324
        %v616 = vunpack.c.l.b16 %v325
        %v617 = vunpack.c.h.b16 %v325
        %v618 = vunpack.c.l.b16 %v326
        %v619 = vunpack.c.h.b16 %v326
        %v620 = vunpack.c.l.b16 %v327
        %v621 = vunpack.c.h.b16 %v327
        %v622 = vunpack.c.l.b16 %v328
        %v623 = vunpack.c.h.b16 %v328
        %v624 = vunpack.c.l.b16 %v329
        %v625 = vunpack.c.h.b16 %v329
        %v626 = vunpack.c.l.b16 %v330
        %v627 = vunpack.c.h.b16 %v330
        %v628 = vunpack.c.l.b16 %v331
        %v629 = vunpack.c.h.b16 %v331
        %v630 = vunpack.c.l.b16 %v332
        %v631 = vunpack.c.h.b16 %v332
        %v632 = vunpack.c.l.b16 %v333
        %v633 = vunpack.c.h.b16 %v333
        %v634 = vunpack.c.l.b16 %v334
        %v635 = vunpack.c.h.b16 %v334
        %v636 = vunpack.c.l.b16 %v335
        %v637 = vunpack.c.h.b16 %v335
        %v638 = vunpack.c.l.b16 %v336
        %v639 = vunpack.c.h.b16 %v336
        %v640 = vunpack.c.l.b16 %v337
        %v641 = vunpack.c.h.b16 %v337
        %v642 = vunpack.c.l.b16 %v338
        %v643 = vunpack.c.h.b16 %v338
        %v644 = vunpack.c.l.b16 %v339
        %v645 = vunpack.c.h.b16 %v339
        %v646 = vunpack.c.l.b16 %v340
        %v647 = vunpack.c.h.b16 %v340
        %v648 = vunpack.c.l.b16 %v341
        %v649 = vunpack.c.h.b16 %v341
        %v650 = vunpack.c.l.b16 %v342
        %v651 = vunpack.c.h.b16 %v342
        %v652 = vunpack.c.l.b16 %v343
        %v653 = vunpack.c.h.b16 %v343
        %v654 = vunpack.c.l.b16 %v344
        %v655 = vunpack.c.h.b16 %v344
        %v656 = vunpack.c.l.b16 %v345
        %v657 = vunpack.c.h.b16 %v345
        %v658 = vunpack.c.l.b16 %v346
        %v659 = vunpack.c.h.b16 %v346
        %v660 = vunpack.c.l.b16 %v347
        %v661 = vunpack.c.h.b16 %v347
        %v662 = vunpack.c.l.b16 %v348
        %v663 = vunpack.c.h.b16 %v348
        %v664 = vunpack.c.l.b16 %v349
        %v665 = vunpack.c.h.b16 %v349
        %v666 = vunpack.c.l.b16 %v350
        %v667 = vunpack.c.h.b16 %v350
        %v668 = vunpack.c.l.b16 %v351
        %v669 = vunpack.c.h.b16 %v351
        %v670 = vunpack.c.l.b16 %v352
        %v671 = vunpack.c.h.b16 %v352
        %v672 = vunpack.c.l.b16 %v353
        %v673 = vunpack.c.h.b16 %v353
        %v674 = vunpack.c.l.b16 %v354
        %v675 = vunpack.c.h.b16 %v354
        %v676 = vunpack.c.l.b16 %v355
        %v677 = vunpack.c.h.b16 %v355
        %v678 = vunpack.c.l.b16 %v356
        %v679 = vunpack.c.h.b16 %v356
        %v680 = vunpack.c.l.b16 %v357
        %v681 = vunpack.c.h.b16 %v357
        %v682 = vunpack.c.l.b16 %v358
        %v683 = vunpack.c.h.b16 %v358
        %v684 = vunpack.c.l.b16 %v359
        %v685 = vunpack.c.h.b16 %v359
        %v686 = vunpack.c.l.b16 %v360
        %v687 = vunpack.c.h.b16 %v360
        %v688 = vunpack.c.l.b16 %v361
        %v689 = vunpack.c.h.b16 %v361
        %v690 = vunpack.c.l.b16 %v362
        %v691 = vunpack.c.h.b16 %v362
        %v692 = vunpack.c.l.b16 %v363
        %v693 = vunpack.c.h.b16 %v363
        %v694 = vunpack.c.l.b16 %v364
        %v695 = vunpack.c.h.b16 %v364
        %v696 = vunpack.c.l.b16 %v365
        %v697 = vunpack.c.h.b16 %v365
        %v698 = vunpack.c.l.b16 %v366
        %v699 = vunpack.c.h.b16 %v366
        %v700 = vunpack.c.l.b16 %v367
        %v701 = vunpack.c.h.b16 %v367
        %v702 = vunpack.c.l.b16 %v368
        %v703 = vunpack.c.h.b16 %v368
        %v704 = vunpack.c.l.b16 %v369
        %v705 = vunpack.c.h.b16 %v369
        %v706 = vunpack.c.l.b16 %v370
        %v707 = vunpack.c.h.b16 %v370
        %v708 = vunpack.c.l.b16 %v371
        %v709 = vunpack.c.h.b16 %v371
        %v710 = vunpack.c.l.b16 %v372
        %v711 = vunpack.c.h.b16 %v372
        %v712 = vunpack.c.l.b16 %v373
        %v713 = vunpack.c.h.b16 %v373
        %v714 = vunpack.c.l.b16 %v374
        %v715 = vunpack.c.h.b16 %v374
        %v716 = vunpack.c.l.b16 %v375
        %v717 = vunpack.c.h.b16 %v375
        %v718 = vunpack.c.l.b16 %v376
        %v719 = vunpack.c.h.b16 %v376
        %v720 = vunpack.c.l.b16 %v377
        %v721 = vunpack.c.h.b16 %v377
        %v722 = vunpack.c.l.b16 %v378
        %v723 = vunpack.c.h.b16 %v378
        %v724 = vunpack.c.l.b16 %v379
        %v725 = vunpack.c.h.b16 %v379
        %v726 = vunpack.c.l.b16 %v380
        %v727 = vunpack.c.h.b16 %v380
        %v728 = vunpack.c.l.b16 %v381
        %v729 = vunpack.c.h.b16 %v381
        %v730 = vunpack.c.l.b16 %v382
        %v731 = vunpack.c.h.b16 %v382
        %v732 = vunpack.c.l.b16 %v383
        %v733 = vunpack.c.h.b16 %v383
        %v734 = vunpack.c.l.b16 %v384
        %v735 = vunpack.c.h.b16 %v384
        %v736 = vunpack.c.l.b16 %v385
        %v737 = vunpack.c.h.b16 %v385
        %v738 = vunpack.c.l.b16 %v386
        %v739 = vunpack.c.h.b16 %v386
        %v740 = vunpack.c.l.b16 %v387
        %v741 = vunpack.c.h.b16 %v387
        %v742 = vunpack.c.l.b16 %v388
        %v743 = vunpack.c.h.b16 %v388
        %v744 = vunpack.c.l.b16 %v389
        %v745 = vunpack.c.h.b16 %v389
        %v746 = vunpack.c.l.b16 %v390
        %v747 = vunpack.c.h.b16 %v390
        %v748 = vunpack.c.l.b16 %v391
        %v749 = vunpack.c.h.b16 %v391
        %v750 = vunpack.c.l.b16 %v392
        %v751 = vunpack.c.h.b16 %v392
        %v752 = vunpack.c.l.b16 %v393
        %v753 = vunpack.c.h.b16 %v393
        %v754 = vunpack.c.l.b16 %v394
        %v755 = vunpack.c.h.b16 %v394
        %v756 = vunpack.c.l.b16 %v395
        %v757 = vunpack.c.h.b16 %v395
        %v758 = vunpack.c.l.b16 %v396
        %v759 = vunpack.c.h.b16 %v396
        %v760 = vunpack.c.l.b16 %v397
        %v761 = vunpack.c.h.b16 %v397
        %v762 = vunpack.c.l.b16 %v398
        %v763 = vunpack.c.h.b16 %v398
        %v764 = vunpack.c.l.b16 %v399
        %v765 = vunpack.c.h.b16 %v399
        %v766 = vunpack.c.l.b16 %v400
        %v767 = vunpack.c.h.b16 %v400
        %v768 = vunpack.c.l.b16 %v401
        %v769 = vunpack.c.h.b16 %v401
        %v770 = vunpack.c.l.b16 %v402
        %v771 = vunpack.c.h.b16 %v402
        %v772 = vunpack.c.l.b16 %v403
        %v773 = vunpack.c.h.b16 %v403
        %v774 = vunpack.c.l.b16 %v404
        %v775 = vunpack.c.h.b16 %v404
        %v776 = vunpack.c.l.b16 %v405
        %v777 = vunpack.c.h.b16 %v405
        %v778 = vunpack.c.l.b16 %v406
        %v779 = vunpack.c.h.b16 %v406
        %v780 = vunpack.c.l.b16 %v407
        %v781 = vunpack.c.h.b16 %v407
        %v782 = vunpack.c.l.b16 %v408
        %v783 = vunpack.c.h.b16 %v408
        %v784 = vunpack.c.l.b16 %v409
        %v785 = vunpack.c.h.b16 %v409
        %v786 = vunpack.c.l.b16 %v410
        %v787 = vunpack.c.h.b16 %v410
        %v788 = vunpack.c.l.b16 %v411
        %v789 = vunpack.c.h.b16 %v411
        %v790 = vunpack.c.l.b16 %v412
        %v791 = vunpack.c.h.b16 %v412
        %v792 = vunpack.c.l.b16 %v413
        %v793 = vunpack.c.h.b16 %v413
        %v794 = vunpack.c.l.b16 %v414
        %v795 = vunpack.c.h.b16 %v414
        %v796 = vunpack.c.l.b16 %v415
        %v797 = vunpack.c.h.b16 %v415
        %v798 = vunpack.c.l.b16 %v416
        %v799 = vunpack.c.h.b16 %v416
        %v800 = vunpack.c.l.b16 %v417
        %v801 = vunpack.c.h.b16 %v417
        %v802 = vunpack.c.l.b16 %v418
        %v803 = vunpack.c.h.b16 %v418
        %v804 = vunpack.c.l.b16 %v419
        %v805 = vunpack.c.h.b16 %v419
        %v806 = vunpack.c.l.b16 %v420
        %v807 = vunpack.c.h.b16 %v420
        %v808 = vunpack.c.l.b16 %v421
        %v809 = vunpack.c.h.b16 %v421
        %v810 = vunpack.c.l.b16 %v422
        %v811 = vunpack.c.h.b16 %v422
        %v812 = vunpack.c.l.b16 %v423
        %v813 = vunpack.c.h.b16 %v423
        %v814 = vunpack.c.l.b16 %v424
        %v815 = vunpack.c.h.b16 %v424
        %v816 = vunpack.c.l.b16 %v425
        %v817 = vunpack.c.h.b16 %v425
        %v818 = vunpack.c.l.b16 %v426
        %v819 = vunpack.c.h.b16 %v426
        %v820 = vunpack.c.l.b16 %v427
        %v821 = vunpack.c.h.b16 %v427
        %v822 = vunpack.c.l.b16 %v428
        %v823 = vunpack.c.h.b16 %v428
        %v824 = vunpack.c.l.b16 %v429
        %v825 = vunpack.c.h.b16 %v429
        %v826 = vunpack.c.l.b16 %v430
        %v827 = vunpack.c.h.b16 %v430
        %v828 = vunpack.c.l.b16 %v431
        %v829 = vunpack.c.h.b16 %v431
        %v830 = vunpack.c.l.b16 %v432
        %v831 = vunpack.c.h.b16 %v432
        %v832 = vunpack.c.l.b16 %v433
        %v833 = vunpack.c.h.b16 %v433
        %v834 = vunpack.c.l.b16 %v434
        %v835 = vunpack.c.h.b16 %v434
        %v836 = vunpack.c.l.b16 %v435
        %v837 = vunpack.c.h.b16 %v435
        %v838 = vpack.c.b16 %v584, %v582
        %v839 = vpack.c.b16 %v585, %v583
        %v840 = vpack.c.b16 %v588, %v586
        %v841 = vpack.c.b16 %v589, %v587
        %v842 = vpack.c.b16 %v592, %v590
        %v843 = vpack.c.b16 %v593, %v591
        %v844 = vpack.c.b16 %v596, %v594
        %v845 = vpack.c.b16 %v597, %v595
        %v846 = vpack.c.b16 %v600, %v598
        %v847 = vpack.c.b16 %v601, %v599
        %v848 = vpack.c.b16 %v604, %v602
        %v849 = vpack.c.b16 %v605, %v603
        %v850 = vpack.c.b16 %v608, %v606
        %v851 = vpack.c.b16 %v609, %v607
        %v852 = vpack.c.b16 %v612, %v610
        %v853 = vpack.c.b16 %v613, %v611
        %v854 = vpack.c.b16 %v616, %v614
        %v855 = vpack.c.b16 %v617, %v615
        %v856 = vpack.c.b16 %v620, %v618
        %v857 = vpack.c.b16 %v621, %v619
        %v858 = vpack.c.b16 %v624, %v622
        %v859 = vpack.c.b16 %v625, %v623
        %v860 = vpack.c.b16 %v628, %v626
        %v861 = vpack.c.b16 %v629, %v627
        %v862 = vpack.c.b16 %v632, %v630
        %v863 = vpack.c.b16 %v633, %v631
        %v864 = vpack.c.b16 %v636, %v634
        %v865 = vpack.c.b16 %v637, %v635
        %v866 = vpack.c.b16 %v640, %v638
        %v867 = vpack.c.b16 %v641, %v639
        %v868 = vpack.c.b16 %v644, %v642
        %v869 = vpack.c.b16 %v645, %v643
        %v870 = vpack.c.b16 %v648, %v646
        %v871 = vpack.c.b16 %v649, %v647
        %v872 = vpack.c.b16 %v652, %v650
        %v873 = vpack.c.b16 %v653, %v651
        %v874 = vpack.c.b16 %v656, %v654
        %v875 = vpack.c.b16 %v657, %v655
        %v876 = vpack.c.b16 %v660, %v658
        %v877 = vpack.c.b16 %v661, %v659
        %v878 = vpack.c.b16 %v664, %v662
        %v879 = vpack.c.b16 %v665, %v663
        %v880 = vpack.c.b16 %v668, %v666
        %v881 = vpack.c.b16 %v669, %v667
        %v882 = vpack.c.b16 %v672, %v670
        %v883 = vpack.c.b16 %v673, %v671
        %v884 = vpack.c.b16 %v676, %v674
        %v885 = vpack.c.b16 %v677, %v675
        %v886 = vpack.c.b16 %v680, %v678
        %v887 = vpack.c.b16 %v681, %v679
        %v888 = vpack.c.b16 %v684, %v682
        %v889 = vpack.c.b16 %v685, %v683
        %v890 = vpack.c.b16 %v688, %v686
        %v891 = vpack.c.b16 %v689, %v687
        %v892 = vpack.c.b16 %v692, %v690
        %v893 = vpack.c.b16 %v693, %v691
        %v894 = vpack.c.b16 %v696, %v694
        %v895 = vpack.c.b16 %v697, %v695
        %v896 = vpack.c.b16 %v700, %v698
        %v897 = vpack.c.b16 %v701, %v699
        %v898 = vpack.c.b16 %v704, %v702
        %v899 = vpack.c.b16 %v705, %v703
        %v900 = vpack.c.b16 %v708, %v706
        %v901 = vpack.c.b16 %v709, %v707
        %v902 = vpack.c.b16 %v712, %v710
        %v903 = vpack.c.b16 %v713, %v711
        %v904 = vpack.c.b16 %v716, %v714
        %v905 = vpack.c.b16 %v717, %v715
        %v906 = vpack.c.b16 %v720, %v718
        %v907 = vpack.c.b16 %v721, %v719
        %v908 = vpack.c.b16 %v724, %v722
        %v909 = vpack.c.b16 %v725, %v723
        %v910 = vpack.c.b16 %v728, %v726
        %v911 = vpack.c.b16 %v729, %v727
        %v912 = vpack.c.b16 %v732, %v730
        %v913 = vpack.c.b16 %v733, %v731
        %v914 = vpack.c.b16 %v736, %v734
        %v915 = vpack.c.b16 %v737, %v735
        %v916 = vpack.c.b16 %v740, %v738
        %v917 = vpack.c.b16 %v741, %v739
        %v918 = vpack.c.b16 %v744, %v742
        %v919 = vpack.c.b16 %v745, %v743
        %v920 = vpack.c.b16 %v748, %v746
        %v921 = vpack.c.b16 %v749, %v747
        %v922 = vpack.c.b16 %v752, %v750
        %v923 = vpack.c.b16 %v753, %v751
        %v924 = vpack.c.b16 %v756, %v754
        %v925 = vpack.c.b16 %v757, %v755
        %v926 = vpack.c.b16 %v760, %v758
        %v927 = vpack.c.b16 %v761, %v759
        %v928 = vpack.c.b16 %v764, %v762
        %v929 = vpack.c.b16 %v765, %v763
        %v930 = vpack.c.b16 %v768, %v766
        %v931 = vpack.c.b16 %v769, %v767
        %v932 = vpack.c.b16 %v772, %v770
        %v933 = vpack.c.b16 %v773, %v771
        %v934 = vpack.c.b16 %v776, %v774
        %v935 = vpack.c.b16 %v777, %v775
        %v936 = vpack.c.b16 %v780, %v778
        %v937 = vpack.c.b16 %v781, %v779
        %v938 = vpack.c.b16 %v784, %v782
        %v939 = vpack.c.b16 %v785, %v783
        %v940 = vpack.c.b16 %v788, %v786
        %v941 = vpack.c.b16 %v789, %v787
        %v942 = vpack.c.b16 %v792, %v790
        %v943 = vpack.c.b16 %v793, %v791
        %v944 = vpack.c.b16 %v796, %v794
        %v945 = vpack.c.b16 %v797, %v795
        %v946 = vpack.c.b16 %v800, %v798
        %v947 = vpack.c.b16 %v801, %v799
        %v948 = vpack.c.b16 %v804, %v802
        %v949 = vpack.c.b16 %v805, %v803
        %v950 = vpack.c.b16 %v808, %v806
        %v951 = vpack.c.b16 %v809, %v807
        %v952 = vpack.c.b16 %v812, %v810
        %v953 = vpack.c.b16 %v813, %v811
        %v954 = vpack.c.b16 %v816, %v814
        %v955 = vpack.c.b16 %v817, %v815
        %v956 = vpack.c.b16 %v820, %v818
        %v957 = vpack.c.b16 %v821, %v819
        %v958 = vpack.c.b16 %v824, %v822
        %v959 = vpack.c.b16 %v825, %v823
        %v960 = vpack.c.b16 %v828, %v826
        %v961 = vpack.c.b16 %v829, %v827
        %v962 = vpack.c.b16 %v832, %v830
        %v963 = vpack.c.b16 %v833, %v831
        %v964 = vpack.c.b16 %v836, %v834
        %v965 = vpack.c.b16 %v837, %v835
        %1094 = vmatprep.subr.bf16.mxu0 %v839
        %1095 = vmatpush1.bf16.msra.mxu0 %v838
        %1096 = vmatprep.subr.bf16.mxu0 %v841
        %1097 = vmatpush1.bf16.msra.mxu0 %v840
        %1098 = vmatprep.subr.bf16.mxu0 %v843
        %1099 = vmatpush1.bf16.msra.mxu0 %v842
        %1100 = vmatprep.subr.bf16.mxu0 %v845
        %1101 = vmatpush1.bf16.msra.mxu0 %v844
        %1102 = vmatprep.subr.bf16.mxu0 %v847
        %1103 = vmatpush1.bf16.msra.mxu0 %v846
        %1104 = vmatprep.subr.bf16.mxu0 %v849
        %1105 = vmatpush1.bf16.msra.mxu0 %v848
        %1106 = vmatprep.subr.bf16.mxu0 %v851
        %1107 = vmatpush1.bf16.msra.mxu0 %v850
        %1108 = vmatprep.subr.bf16.mxu0 %v853
        %1109 = vmatpush1.bf16.msra.mxu0 %v852
        %1110 = vmatprep.subr.bf16.mxu0 %v855
        %1111 = vmatpush1.bf16.msra.mxu0 %v854
        %1112 = vmatprep.subr.bf16.mxu0 %v857
        %1113 = vmatpush1.bf16.msra.mxu0 %v856
        %1114 = vmatprep.subr.bf16.mxu0 %v859
        %1115 = vmatpush1.bf16.msra.mxu0 %v858
        %1116 = vmatprep.subr.bf16.mxu0 %v861
        %1117 = vmatpush1.bf16.msra.mxu0 %v860
        %1118 = vmatprep.subr.bf16.mxu0 %v863
        %1119 = vmatpush1.bf16.msra.mxu0 %v862
        %1120 = vmatprep.subr.bf16.mxu0 %v865
        %1121 = vmatpush1.bf16.msra.mxu0 %v864
        %1122 = vmatprep.subr.bf16.mxu0 %v867
        %1123 = vmatpush1.bf16.msra.mxu0 %v866
        %1124 = vmatprep.subr.bf16.mxu0 %v869
        %1125 = vmatpush1.bf16.msra.mxu0 %v868
        %1126 = vmatprep.mubr.bf16.mxu0 %v445
        %1127 = vmatmul.mubr.bf16.gmra.mrb[0].mxu0 %v444
        %v1128 = vpop.f32.mrb[0].mxu0
        %v1129 = vadd.f32 0.0, %v1128
        %v1130 = vpop.f32.mrb[0].mxu0
        %v1131 = vadd.f32 0.0, %v1130
        %v1132 = vpop.f32.mrb[0].mxu0
        %v1133 = vpop.f32.mrb[0].mxu0
        %1134 = vdwg.mxu0
        %1135 = vmatprep.subr.bf16.mxu0 %v871
        %1136 = vmatpush1.bf16.msra.mxu0 %v870
        %1137 = vmatprep.subr.bf16.mxu0 %v873
        %1138 = vmatpush1.bf16.msra.mxu0 %v872
        %1139 = vmatprep.subr.bf16.mxu0 %v875
        %1140 = vmatpush1.bf16.msra.mxu0 %v874
        %1141 = vmatprep.subr.bf16.mxu0 %v877
        %1142 = vmatpush1.bf16.msra.mxu0 %v876
        %1143 = vmatprep.subr.bf16.mxu0 %v879
        %1144 = vmatpush1.bf16.msra.mxu0 %v878
        %1145 = vmatprep.subr.bf16.mxu0 %v881
        %1146 = vmatpush1.bf16.msra.mxu0 %v880
        %1147 = vmatprep.subr.bf16.mxu0 %v883
        %1148 = vmatpush1.bf16.msra.mxu0 %v882
        %1149 = vmatprep.subr.bf16.mxu0 %v885
        %1150 = vmatpush1.bf16.msra.mxu0 %v884
        %1151 = vmatprep.subr.bf16.mxu0 %v887
        %1152 = vmatpush1.bf16.msra.mxu0 %v886
        %1153 = vmatprep.subr.bf16.mxu0 %v889
        %1154 = vmatpush1.bf16.msra.mxu0 %v888
        %1155 = vmatprep.subr.bf16.mxu0 %v891
        %1156 = vmatpush1.bf16.msra.mxu0 %v890
        %1157 = vmatprep.subr.bf16.mxu0 %v893
        %1158 = vmatpush1.bf16.msra.mxu0 %v892
        %1159 = vmatprep.subr.bf16.mxu0 %v895
        %1160 = vmatpush1.bf16.msra.mxu0 %v894
        %1161 = vmatprep.subr.bf16.mxu0 %v897
        %1162 = vmatpush1.bf16.msra.mxu0 %v896
        %1163 = vmatprep.subr.bf16.mxu0 %v899
        %1164 = vmatpush1.bf16.msra.mxu0 %v898
        %1165 = vmatprep.subr.bf16.mxu0 %v901
        %1166 = vmatpush1.bf16.msra.mxu0 %v900
        %1167 = vmatprep.mubr.bf16.mxu0 %v447
        %1168 = vmatmul.mubr.bf16.gmra.mrb[0].mxu0 %v446
        %v1169 = vpop.f32.mrb[0].mxu0
        %v1170 = vadd.f32 %v1129, %v1169
        %v1171 = vpop.f32.mrb[0].mxu0
        %v1172 = vadd.f32 %v1131, %v1171
        %v1173 = vpop.f32.mrb[0].mxu0
        %v1174 = vpop.f32.mrb[0].mxu0
        %1175 = vdwg.mxu0
        %1176 = vmatprep.subr.bf16.mxu0 %v903
        %1177 = vmatpush1.bf16.msra.mxu0 %v902
        %1178 = vmatprep.subr.bf16.mxu0 %v905
        %1179 = vmatpush1.bf16.msra.mxu0 %v904
        %1180 = vmatprep.subr.bf16.mxu0 %v907
        %1181 = vmatpush1.bf16.msra.mxu0 %v906
        %1182 = vmatprep.subr.bf16.mxu0 %v909
        %1183 = vmatpush1.bf16.msra.mxu0 %v908
        %1184 = vmatprep.subr.bf16.mxu0 %v911
        %1185 = vmatpush1.bf16.msra.mxu0 %v910
        %1186 = vmatprep.subr.bf16.mxu0 %v913
        %1187 = vmatpush1.bf16.msra.mxu0 %v912
        %1188 = vmatprep.subr.bf16.mxu0 %v915
        %1189 = vmatpush1.bf16.msra.mxu0 %v914
        %1190 = vmatprep.subr.bf16.mxu0 %v917
        %1191 = vmatpush1.bf16.msra.mxu0 %v916
        %1192 = vmatprep.subr.bf16.mxu0 %v919
        %1193 = vmatpush1.bf16.msra.mxu0 %v918
        %1194 = vmatprep.subr.bf16.mxu0 %v921
        %1195 = vmatpush1.bf16.msra.mxu0 %v920
        %1196 = vmatprep.subr.bf16.mxu0 %v923
        %1197 = vmatpush1.bf16.msra.mxu0 %v922
        %1198 = vmatprep.subr.bf16.mxu0 %v925
        %1199 = vmatpush1.bf16.msra.mxu0 %v924
        %1200 = vmatprep.subr.bf16.mxu0 %v927
        %1201 = vmatpush1.bf16.msra.mxu0 %v926
        %1202 = vmatprep.subr.bf16.mxu0 %v929
        %1203 = vmatpush1.bf16.msra.mxu0 %v928
        %1204 = vmatprep.subr.bf16.mxu0 %v931
        %1205 = vmatpush1.bf16.msra.mxu0 %v930
        %1206 = vmatprep.subr.bf16.mxu0 %v933
        %1207 = vmatpush1.bf16.msra.mxu0 %v932
        %1208 = vmatprep.mubr.bf16.mxu0 %v449
        %1209 = vmatmul.mubr.bf16.gmra.mrb[0].mxu0 %v448
        %v1210 = vpop.f32.mrb[0].mxu0
        %v1211 = vadd.f32 %v1170, %v1210
        %v1212 = vpop.f32.mrb[0].mxu0
        %v1213 = vadd.f32 %v1172, %v1212
        %v1214 = vpop.f32.mrb[0].mxu0
        %v1215 = vpop.f32.mrb[0].mxu0
        %1216 = vdwg.mxu0
        %1217 = vmatprep.subr.bf16.mxu0 %v935
        %1218 = vmatpush1.bf16.msra.mxu0 %v934
        %1219 = vmatprep.subr.bf16.mxu0 %v937
        %1220 = vmatpush1.bf16.msra.mxu0 %v936
        %1221 = vmatprep.subr.bf16.mxu0 %v939
        %1222 = vmatpush1.bf16.msra.mxu0 %v938
        %1223 = vmatprep.subr.bf16.mxu0 %v941
        %1224 = vmatpush1.bf16.msra.mxu0 %v940
        %1225 = vmatprep.subr.bf16.mxu0 %v943
        %1226 = vmatpush1.bf16.msra.mxu0 %v942
        %1227 = vmatprep.subr.bf16.mxu0 %v945
        %1228 = vmatpush1.bf16.msra.mxu0 %v944
        %1229 = vmatprep.subr.bf16.mxu0 %v947
        %1230 = vmatpush1.bf16.msra.mxu0 %v946
        %1231 = vmatprep.subr.bf16.mxu0 %v949
        %1232 = vmatpush1.bf16.msra.mxu0 %v948
        %1233 = vmatprep.subr.bf16.mxu0 %v951
        %1234 = vmatpush1.bf16.msra.mxu0 %v950
        %1235 = vmatprep.subr.bf16.mxu0 %v953
        %1236 = vmatpush1.bf16.msra.mxu0 %v952
        %1237 = vmatprep.subr.bf16.mxu0 %v955
        %1238 = vmatpush1.bf16.msra.mxu0 %v954
        %1239 = vmatprep.subr.bf16.mxu0 %v957
        %1240 = vmatpush1.bf16.msra.mxu0 %v956
        %1241 = vmatprep.subr.bf16.mxu0 %v959
        %1242 = vmatpush1.bf16.msra.mxu0 %v958
        %1243 = vmatprep.subr.bf16.mxu0 %v961
        %1244 = vmatpush1.bf16.msra.mxu0 %v960
        %1245 = vmatprep.subr.bf16.mxu0 %v963
        %1246 = vmatpush1.bf16.msra.mxu0 %v962
        %1247 = vmatprep.subr.bf16.mxu0 %v965
        %1248 = vmatpush1.bf16.msra.mxu0 %v964
        %1249 = vmatprep.mubr.bf16.mxu0 %v451
        %1250 = vmatmul.mubr.bf16.gmra.mrb[0].mxu0 %v450
        %v1251 = vpop.f32.mrb[0].mxu0
        %v1252 = vadd.f32 %v1211, %v1251
        %v1253 = vpop.f32.mrb[0].mxu0
        %v1254 = vadd.f32 %v1213, %v1253
        %v1255 = vpop.f32.mrb[0].mxu0
        %v1256 = vpop.f32.mrb[0].mxu0
        %1257 = vdwg.mxu0
        %v1258 = vadd.f32 %v452, %v1252
        %v1259 = vadd.f32 %v453, %v1254
        %1260 = vst [vmem:[%s292] sm:$0xff] %v1258
        %1261 = vst [vmem:[%s292 + $0x8] sm:$0xff] %v1259
        // Predicated region
        $region53: #{tpu_custom_call.1} parent=35 // pred_check
          %p1262 = pneg %p302
        $region54: #{tpu_custom_call.1} parent=35 // pred_check_branch
          %1264 = sbr.rel (%p1262) target = $region56
        $region55: #{tpu_custom_call.1} parent=35 // pred_region
          %v1265 = vld [vmem:[%s292] sm:$0xff]
          %v1266 = vld [vmem:[%s292 + $0x8] sm:$0xff]
          %s1267 = sld [smem:[#allocation2]]
          %v1268 = vstv %s1267
          %v1269 = vmul.f32 %v1265, %v1268
          %v1270 = vmul.f32 %v1266, %v1268
          %v1271 = vld [vmem:[%s299] sm:$0x3]
          %s1272 = sld [smem:[#allocation2 + $0x1]]
          %v1273 = vstv %s1272
          %v1274 = vmul.f32 %v1271, %v1273
          %v1276 = vlaneseq
          %v1277 = vshrl.u32 %v1276, 7
          %v1278 = vsub.s32 0, %v1277
          %v1279 = vrot.slane %v1274, %v1278
          %v1280 = vlaneseq
          %v1281 = vshrl.u32 %v1280, 7
          %v1282 = vsub.s32 1, %v1281
          %v1283 = vrot.slane %v1274, %v1282
          %v1286 = vadd.f32 %v1269, %v1279
          %v1287 = vadd.f32 %v1270, %v1283
          %vm1288 = vcmp.ge.f32.partialorder %v1286, 0.0
          %vm1289 = vcmp.ge.f32.partialorder %v1287, 0.0
          %v1290 = vmul.f32 %v1286, 0.2
          %v1291 = vmul.f32 %v1287, 0.2
          %v1292 = vsel %vm1288, %v1286, %v1290
          %v1293 = vsel %vm1289, %v1287, %v1291
          %1294 = vst [vmem:[%s292] sm:$0xff] %v1292
          %1295 = vst [vmem:[%s292 + $0x8] sm:$0xff] %v1293
        $region56: #{tpu_custom_call.1} parent=35 // pred_fallthru
          _
        %s1296 = sand.u32 %s155, 1
        %s1297 = scalar_lea.sflag [#allocation4], %s1296
        %s1298 = sand.u32 %s155, 1
        %s1299 = smul.addr %s1298, 16
        %s1300 = scalar_lea.vmem [#allocation9], %s1299
        // Predicated region
        $region57: #{tpu_custom_call.1} parent=35 // pred_check
          %p1301 = pneg %p165
        $region58: #{tpu_custom_call.1} parent=35 // pred_check_branch
          %1303 = sbr.rel (%p1301) target = $region60
        $region59: #{tpu_custom_call.1} parent=35 // pred_region
          %s1304 = smul.u32 2, %s28
          %s1306 = ssub.s32 256, 256
          %1307 = vsyncadd %s1297, %s1306
          %s1308 = smul.addr %s29, 4
          %s1309 = sadd.s32 %s1304, %s1308
          %s1310 = smul.addr %s1309, 128
          %s1311 = scalar_lea.hbm %s4, %s1310
          %s1313 = sshll.u32 %s1300, 4
          %s1314 = int_to_ptr.vmem [resolvable:$true] %s1313
          %1316 = dma.vmem_to_hbm [thread:$0]  %s1314, 256, %s1311, %s1297
        $region60: #{tpu_custom_call.1} parent=35 // pred_fallthru
          _
      $region36: #{tpu_custom_call.1} parent=5 // pred_fallthru
        _
      %p1317 = scmp.le.s32.totalorder 2, %s18
      // Predicated region
      $region61: #{tpu_custom_call.1} parent=5 // pred_check
        %p1318 = pneg %p1317
      $region62: #{tpu_custom_call.1} parent=5 // pred_check_branch
        %1320 = sbr.rel (%p1318) target = $region64
      $region63: #{tpu_custom_call.1} parent=5 // pred_region
        %s1321 = ssub.s32 %s18, 2
        // Predicated region
        $region65: #{tpu_custom_call.1} parent=63 // pred_check
          %p1322 = pneg %p171
        $region66: #{tpu_custom_call.1} parent=63 // pred_check_branch
          %1324 = sbr.rel (%p1322) target = $region68
        $region67: #{tpu_custom_call.1} parent=63 // pred_region
          %s1325 = sand.u32 %s156, 1
          %s1326 = scalar_lea.sflag [#allocation4], %s1325
          %s1327 = sand.u32 %s156, 1
          %s1328 = smul.addr %s1327, 16
          %s1329 = scalar_lea.vmem [#allocation9], %s1328
          %1330 = dma.done %s1326, 256
        $region68: #{tpu_custom_call.1} parent=63 // pred_fallthru
          _
      $region64: #{tpu_custom_call.1} parent=5 // pred_fallthru
        _
    $region6: #{tpu_custom_call.1} parent=1 // loop_footer
      %s22 = sadd.s32 1, %s18
    $region7: #{tpu_custom_call.1} parent=1 // loop_footer_branch
      %17 = sbr.rel target = $region3
    $region8: #{tpu_custom_call.1} parent=1 // loop_exit
      _
    %1331 = vsyncpa [#allocation3], 1
    %s1332 = scalar_lea.sflag [#allocation3], 1
    %1333 = vsyncpa %s1332, 1
    %1334 = vsyncpa [#allocation8], 1
    %s1335 = scalar_lea.sflag [#allocation8], 1
    %1336 = vsyncpa %s1335, 1
    %1337 = vsyncpa [#allocation4], 1
    %s1338 = scalar_lea.sflag [#allocation4], 1
    %1339 = vsyncpa %s1338, 1
    %1340 = vsyncpa [#allocation5], 1
    %s1341 = scalar_lea.sflag [#allocation5], 1
    %1342 = vsyncpa %s1341, 1

</llo_original>
